<compile_context>
chip_gen: v7x
topology: tpu7x:2x2x1
jax: 0.10.0
libtpu: 0.0.40
codegen_flags: <defaults>
</compile_context>

<pallas_src>
import jax
import jax.numpy as jnp
from jax import lax
from jax.experimental import pallas as pl
from jax.experimental.pallas import tpu as pltpu


def _round_up(x: int, m: int) -> int:
    return (x + m - 1) // m * m


def _round_down(x: int, m: int) -> int:
    return x // m * m


_TARGET_BLOCK_BYTES = 2 * 1024 * 1024   # ~2 MiB output block: safe on v5e..v7x
_VMEM_TABLE_BUDGET = 4 * 1024 * 1024    # keep table resident in VMEM below this
_XLA_TINY_BYTES = 256 * 1024            # below this, plain XLA gather is faster


def _pick_rows_per_step(N: int, D: int, itemsize: int) -> int:
    """Rows per grid step: byte-budgeted, sublane-dense, capped near N."""
    r_min = max(8, 32 // max(1, itemsize))          # 8 f32, 16 bf16, 32 int8
    row_bytes = _round_up(D, 128) * itemsize        # lane-tiled VMEM row footprint
    r = _TARGET_BLOCK_BYTES // max(1, row_bytes)
    r = min(128, max(r_min, _round_down(r, r_min)))
    r = min(r, _round_up(max(N, 1), r_min))         # limit spurious tail work
    return max(r_min, r)


def _make_vmem_gather_kernel(rows_per_step: int):
    """Gather from a VMEM-resident table with dynamic vector reads."""
    R = rows_per_step

    def kernel(idx_ref, w_ref, out_ref):
        # idx_ref: (N_pad,) int32 in SMEM (scalar prefetch)
        # w_ref:   (V, D) full table, resident in VMEM (constant index_map)
        # out_ref: (R, D) VMEM output block for this grid step
        base = pl.program_id(0) * R
        for r in range(R):                  # static dest rows -> plain vst path
            row = idx_ref[base + r]
            out_ref[r, :] = w_ref[row, :]

    return kernel


def _make_hbm_gather_kernel(rows_per_step: int):
    """Gather rows straight from HBM into the output VMEM block via DMAs."""
    R = rows_per_step
    unroll = R if R <= 16 else 8            # avoid 128x descriptor-stream bloat

    def kernel(idx_ref, w_hbm_ref, out_ref, sem):
        # idx_ref:   (N_pad,) int32 in SMEM (scalar prefetch)
        # w_hbm_ref: (V, D) weight table left in HBM (memory_space=pl.ANY)
        # out_ref:   (R, D) VMEM output block for this grid step
        # sem:       (1,) DMA semaphore shared by all R row copies
        base = pl.program_id(0) * R

        def start_one(r, carry):
            row = idx_ref[base + r]
            pltpu.make_async_copy(
                w_hbm_ref.at[row], out_ref.at[r], sem.at[0]
            ).start()
            return carry

        # Issue all R row gathers back to back so they overlap in flight.
        lax.fori_loop(0, R, start_one, 0, unroll=unroll)

        # Single wait sized to the aggregate of all R rows (DMA semaphores
        # count bytes, so one wait drains the R starts above).
        pltpu.make_async_copy(
            w_hbm_ref.at[pl.ds(0, R)], out_ref, sem.at[0]
        ).wait()

    return kernel


def find_feature_pallas(weight: jax.Array, index: jax.Array, *, path: str = "auto"):
    """Equivalent of `weight[index]` for weight (V, D) and index (N,)."""
    V, D = weight.shape
    (N,) = index.shape
    itemsize = jnp.dtype(weight.dtype).itemsize

    # Index normalization: wrap negatives (torch semantics); clamp for DMA safety.
    # NOTE: out-of-range indices are clamped where PyTorch would raise.
    idx = index.astype(jnp.int32)
    idx = jnp.where(idx < 0, idx + V, idx)
    idx = jnp.clip(idx, 0, max(V - 1, 0))

    out_bytes = N * D * itemsize
    table_vmem_bytes = _round_up(max(V, 1), 8) * _round_up(D, 128) * itemsize

    if path == "auto":
        if out_bytes < _XLA_TINY_BYTES:
            path = "xla"                   # kernel launch overhead dominates
        elif table_vmem_bytes <= _VMEM_TABLE_BUDGET:
            path = "vmem"
        else:
            path = "hbm"

    if path == "xla":
        return jnp.take(weight, idx, axis=0)

    R = _pick_rows_per_step(N, D, itemsize)

    if path == "hbm":
        # The single aggregate wait slices R rows of the table -> need V >= R.
        R = min(R, _round_down(V, 8)) if V >= 8 else 0
        if R < 8:
            # TODO(synk): tables with V < 8 rows that also overflow VMEM have no
            # clean single-wait tiling here; fall back to the XLA gather.
            return jnp.take(weight, idx, axis=0)

    block_bytes = R * _round_up(D, 128) * itemsize
    if 2 * block_bytes > 12 * 1024 * 1024:
        # TODO(synk): rows wider than ~1.5 MiB need a D-tiled gather; fall back.
        return jnp.take(weight, idx, axis=0)

    N_pad = _round_up(N, R)
    if N_pad != N:
        idx = jnp.pad(idx, (0, N_pad - N))  # padded rows gather row 0, sliced off

    grid = (N_pad // R,)
    out_spec = pl.BlockSpec((R, D), lambda i, idx_ref: (i, 0))
    out_shape = jax.ShapeDtypeStruct((N_pad, D), weight.dtype)

    if path == "vmem":
        grid_spec = pltpu.PrefetchScalarGridSpec(
            num_scalar_prefetch=1,           # index -> SMEM before the grid
            grid=grid,
            in_specs=[
                # Whole table as one block with a constant index_map: DMA'd into
                # VMEM once and kept resident across all grid steps.
                pl.BlockSpec((V, D), lambda i, idx_ref: (0, 0)),
            ],
            out_specs=out_spec,
        )
        kernel = _make_vmem_gather_kernel(R)
    else:  # "hbm"
        grid_spec = pltpu.PrefetchScalarGridSpec(
            num_scalar_prefetch=1,
            grid=grid,
            in_specs=[pl.BlockSpec(memory_space=pl.ANY)],   # weight stays in HBM
            out_specs=out_spec,
            scratch_shapes=[pltpu.SemaphoreType.DMA((1,))],
        )
        kernel = _make_hbm_gather_kernel(R)

    out = pl.pallas_call(
        kernel,
        out_shape=out_shape,
        grid_spec=grid_spec,
        compiler_params=pltpu.CompilerParams(
            # Independent row blocks.  TODO(synk): use pltpu.CORE_PARALLEL on v7x
            # to split this descriptor/scalar-bound grid across both TensorCores.
            dimension_semantics=("parallel",),
        ),
    )(idx, weight)

    return out[:N] if N_pad != N else out


if __name__ == "__main__":
    key = jax.random.PRNGKey(0)
    k_w, k_i = jax.random.split(key)

    V, D, N = 16, 128, 8  # small synthetic shapes: 16 feature rows of width 128
    weight = jax.random.normal(k_w, (V, D), dtype=jnp.float32)
    index = jax.random.randint(k_i, (N,), minval=0, maxval=V, dtype=jnp.int32)

    ref = weight[index]   # plain-JAX semantics of the module's forward

    # Exercise both Pallas paths explicitly (auto would take the tiny-XLA path).
    for p in ("vmem", "hbm"):
        out = jax.block_until_ready(find_feature_pallas(weight, index, path=p))
        assert out.shape == (N, D), f"bad shape on path={p}"
        assert out.dtype == weight.dtype, f"bad dtype on path={p}"
        assert bool(jnp.allclose(out, ref)), f"Pallas gather mismatch on path={p}"

    # Auto path (tiny output -> XLA fast path) must match as well.
    out = jax.block_until_ready(find_feature_pallas(weight, index))
    assert bool(jnp.allclose(out, ref)), "auto-path mismatch vs weight[index]"

    print("KERNEL_OK")
</pallas_src>

<mosaic_0001>
module attributes {stable_mosaic.version = 11 : i64} {
  func.func @kernel(%arg0: i32, %arg1: memref<8xi32, #tpu.memory_space<smem>>, %arg2: memref<16x128xf32, #tpu.memory_space<vmem>>, %arg3: memref<8x128xf32, #tpu.memory_space<vmem>>) attributes {dimension_semantics = [#tpu.dimension_semantics<parallel>], iteration_bounds = array<i64: 1>, scalar_prefetch = 1 : i64, scratch_operands = 0 : i64, tpu.core_type = #tpu.core_type<tc>, window_params = [{pipeline_mode = #tpu.pipeline_mode<synchronous>, transform_indices = @transform_0, window_bounds = array<i64: 16, 128>}, {transform_indices = @transform_1, window_bounds = array<i64: 8, 128>}]} {
    %c8_i32 = arith.constant 8 : i32
    %0 = arith.muli %arg0, %c8_i32 : i32
    %c0_i32 = arith.constant 0 : i32
    %1 = arith.addi %0, %c0_i32 : i32
    %2 = arith.index_cast %1 : i32 to index
    %3 = memref.load %arg1[%2] : memref<8xi32, #tpu.memory_space<smem>>
    %4 = arith.index_cast %3 : i32 to index
    %c0 = arith.constant 0 : index
    %5 = vector.load %arg2[%4, %c0] : memref<16x128xf32, #tpu.memory_space<vmem>>, vector<1x128xf32>
    %6 = vector.shape_cast %5 : vector<1x128xf32> to vector<128xf32>
    %c0_0 = arith.constant 0 : index
    %c0_1 = arith.constant 0 : index
    %7 = vector.load %arg3[%c0_0, %c0_1] : memref<8x128xf32, #tpu.memory_space<vmem>>, vector<1x128xf32>
    %8 = vector.shape_cast %7 : vector<1x128xf32> to vector<128xf32>
    %9 = vector.shape_cast %6 : vector<128xf32> to vector<1x128xf32>
    tpu.vector_store %arg3[%c0_0, %c0_1], %9 {strides = array<i32>} : memref<8x128xf32, #tpu.memory_space<vmem>>, vector<1x128xf32>,
    %c1_i32 = arith.constant 1 : i32
    %10 = arith.addi %0, %c1_i32 : i32
    %11 = arith.index_cast %10 : i32 to index
    %12 = memref.load %arg1[%11] : memref<8xi32, #tpu.memory_space<smem>>
    %13 = arith.index_cast %12 : i32 to index
    %c0_2 = arith.constant 0 : index
    %14 = vector.load %arg2[%13, %c0_2] : memref<16x128xf32, #tpu.memory_space<vmem>>, vector<1x128xf32>
    %15 = vector.shape_cast %14 : vector<1x128xf32> to vector<128xf32>
    %c1 = arith.constant 1 : index
    %c0_3 = arith.constant 0 : index
    %16 = vector.load %arg3[%c1, %c0_3] : memref<8x128xf32, #tpu.memory_space<vmem>>, vector<1x128xf32>
    %17 = vector.shape_cast %16 : vector<1x128xf32> to vector<128xf32>
    %18 = vector.shape_cast %15 : vector<128xf32> to vector<1x128xf32>
    tpu.vector_store %arg3[%c1, %c0_3], %18 {strides = array<i32>} : memref<8x128xf32, #tpu.memory_space<vmem>>, vector<1x128xf32>,
    %c2_i32 = arith.constant 2 : i32
    %19 = arith.addi %0, %c2_i32 : i32
    %20 = arith.index_cast %19 : i32 to index
    %21 = memref.load %arg1[%20] : memref<8xi32, #tpu.memory_space<smem>>
    %22 = arith.index_cast %21 : i32 to index
    %c0_4 = arith.constant 0 : index
    %23 = vector.load %arg2[%22, %c0_4] : memref<16x128xf32, #tpu.memory_space<vmem>>, vector<1x128xf32>
    %24 = vector.shape_cast %23 : vector<1x128xf32> to vector<128xf32>
    %c2 = arith.constant 2 : index
    %c0_5 = arith.constant 0 : index
    %25 = vector.load %arg3[%c2, %c0_5] : memref<8x128xf32, #tpu.memory_space<vmem>>, vector<1x128xf32>
    %26 = vector.shape_cast %25 : vector<1x128xf32> to vector<128xf32>
    %27 = vector.shape_cast %24 : vector<128xf32> to vector<1x128xf32>
    tpu.vector_store %arg3[%c2, %c0_5], %27 {strides = array<i32>} : memref<8x128xf32, #tpu.memory_space<vmem>>, vector<1x128xf32>,
    %c3_i32 = arith.constant 3 : i32
    %28 = arith.addi %0, %c3_i32 : i32
    %29 = arith.index_cast %28 : i32 to index
    %30 = memref.load %arg1[%29] : memref<8xi32, #tpu.memory_space<smem>>
    %31 = arith.index_cast %30 : i32 to index
    %c0_6 = arith.constant 0 : index
    %32 = vector.load %arg2[%31, %c0_6] : memref<16x128xf32, #tpu.memory_space<vmem>>, vector<1x128xf32>
    %33 = vector.shape_cast %32 : vector<1x128xf32> to vector<128xf32>
    %c3 = arith.constant 3 : index
    %c0_7 = arith.constant 0 : index
    %34 = vector.load %arg3[%c3, %c0_7] : memref<8x128xf32, #tpu.memory_space<vmem>>, vector<1x128xf32>
    %35 = vector.shape_cast %34 : vector<1x128xf32> to vector<128xf32>
    %36 = vector.shape_cast %33 : vector<128xf32> to vector<1x128xf32>
    tpu.vector_store %arg3[%c3, %c0_7], %36 {strides = array<i32>} : memref<8x128xf32, #tpu.memory_space<vmem>>, vector<1x128xf32>,
    %c4_i32 = arith.constant 4 : i32
    %37 = arith.addi %0, %c4_i32 : i32
    %38 = arith.index_cast %37 : i32 to index
    %39 = memref.load %arg1[%38] : memref<8xi32, #tpu.memory_space<smem>>
    %40 = arith.index_cast %39 : i32 to index
    %c0_8 = arith.constant 0 : index
    %41 = vector.load %arg2[%40, %c0_8] : memref<16x128xf32, #tpu.memory_space<vmem>>, vector<1x128xf32>
    %42 = vector.shape_cast %41 : vector<1x128xf32> to vector<128xf32>
    %c4 = arith.constant 4 : index
    %c0_9 = arith.constant 0 : index
    %43 = vector.load %arg3[%c4, %c0_9] : memref<8x128xf32, #tpu.memory_space<vmem>>, vector<1x128xf32>
    %44 = vector.shape_cast %43 : vector<1x128xf32> to vector<128xf32>
    %45 = vector.shape_cast %42 : vector<128xf32> to vector<1x128xf32>
    tpu.vector_store %arg3[%c4, %c0_9], %45 {strides = array<i32>} : memref<8x128xf32, #tpu.memory_space<vmem>>, vector<1x128xf32>,
    %c5_i32 = arith.constant 5 : i32
    %46 = arith.addi %0, %c5_i32 : i32
    %47 = arith.index_cast %46 : i32 to index
    %48 = memref.load %arg1[%47] : memref<8xi32, #tpu.memory_space<smem>>
    %49 = arith.index_cast %48 : i32 to index
    %c0_10 = arith.constant 0 : index
    %50 = vector.load %arg2[%49, %c0_10] : memref<16x128xf32, #tpu.memory_space<vmem>>, vector<1x128xf32>
    %51 = vector.shape_cast %50 : vector<1x128xf32> to vector<128xf32>
    %c5 = arith.constant 5 : index
    %c0_11 = arith.constant 0 : index
    %52 = vector.load %arg3[%c5, %c0_11] : memref<8x128xf32, #tpu.memory_space<vmem>>, vector<1x128xf32>
    %53 = vector.shape_cast %52 : vector<1x128xf32> to vector<128xf32>
    %54 = vector.shape_cast %51 : vector<128xf32> to vector<1x128xf32>
    tpu.vector_store %arg3[%c5, %c0_11], %54 {strides = array<i32>} : memref<8x128xf32, #tpu.memory_space<vmem>>, vector<1x128xf32>,
    %c6_i32 = arith.constant 6 : i32
    %55 = arith.addi %0, %c6_i32 : i32
    %56 = arith.index_cast %55 : i32 to index
    %57 = memref.load %arg1[%56] : memref<8xi32, #tpu.memory_space<smem>>
    %58 = arith.index_cast %57 : i32 to index
    %c0_12 = arith.constant 0 : index
    %59 = vector.load %arg2[%58, %c0_12] : memref<16x128xf32, #tpu.memory_space<vmem>>, vector<1x128xf32>
    %60 = vector.shape_cast %59 : vector<1x128xf32> to vector<128xf32>
    %c6 = arith.constant 6 : index
    %c0_13 = arith.constant 0 : index
    %61 = vector.load %arg3[%c6, %c0_13] : memref<8x128xf32, #tpu.memory_space<vmem>>, vector<1x128xf32>
    %62 = vector.shape_cast %61 : vector<1x128xf32> to vector<128xf32>
    %63 = vector.shape_cast %60 : vector<128xf32> to vector<1x128xf32>
    tpu.vector_store %arg3[%c6, %c0_13], %63 {strides = array<i32>} : memref<8x128xf32, #tpu.memory_space<vmem>>, vector<1x128xf32>,
    %c7_i32 = arith.constant 7 : i32
    %64 = arith.addi %0, %c7_i32 : i32
    %65 = arith.index_cast %64 : i32 to index
    %66 = memref.load %arg1[%65] : memref<8xi32, #tpu.memory_space<smem>>
    %67 = arith.index_cast %66 : i32 to index
    %c0_14 = arith.constant 0 : index
    %68 = vector.load %arg2[%67, %c0_14] : memref<16x128xf32, #tpu.memory_space<vmem>>, vector<1x128xf32>
    %69 = vector.shape_cast %68 : vector<1x128xf32> to vector<128xf32>
    %c7 = arith.constant 7 : index
    %c0_15 = arith.constant 0 : index
    %70 = vector.load %arg3[%c7, %c0_15] : memref<8x128xf32, #tpu.memory_space<vmem>>, vector<1x128xf32>
    %71 = vector.shape_cast %70 : vector<1x128xf32> to vector<128xf32>
    %72 = vector.shape_cast %69 : vector<128xf32> to vector<1x128xf32>
    tpu.vector_store %arg3[%c7, %c0_15], %72 {strides = array<i32>} : memref<8x128xf32, #tpu.memory_space<vmem>>, vector<1x128xf32>,
    return
  }
  func.func @transform_0(%arg0: i32, %arg1: memref<8xi32, #tpu.memory_space<smem>>) -> (i32, i32) {
    %c0_i32 = arith.constant 0 : i32
    %c0_i32_0 = arith.constant 0 : i32
    %c0_i32_1 = arith.constant 0 : i32
    return %c0_i32, %c0_i32_0 : i32, i32
  }
  func.func @transform_1(%arg0: i32, %arg1: memref<8xi32, #tpu.memory_space<smem>>) -> (i32, i32) {
    %c0_i32 = arith.constant 0 : i32
    %c0_i32_0 = arith.constant 0 : i32
    return %arg0, %c0_i32 : i32, i32
  }
}

</mosaic_0001>

<llo_original>
// kernel: tpu_custom_call.1
$region0: #{tpu_custom_call.1}
  #allocation0 [shape = 'u32[]', space=smem, size = 0x4, offset = 0x4, fixed_abs, tag = 'smem constant byte address 0x4 - core index']
  #allocation1 [shape = 'u32[144,128]{1,0:T(1,128)}', space=vmem, size = 0x12000, scoped, tag = 'internal scratch']
  #allocation2 [shape = 's32[1]{0}', space=sflag, size = 0x4, scoped, tag = 'scoped memory for tpu_custom_call.1']
  #allocation3 [shape = 'u8[512]{0}', space=smem, size = 0x200, scoped, tag = 'prefetched SMEM operand 0']
  %s0 = inlined_call_operand.hbm [shape: s32[8], index: 0, kind: input, shape index: {}]
  %s1 = inlined_call_operand.hbm [shape: f32[16,128], index: 1, kind: input, shape index: {}]
  %s2 = inlined_call_operand.hbm [shape: f32[8,128], index: 2, kind: output, shape index: {}]
  %s3 = sld [smem:[#allocation0]]
  $region18: #{tpu_custom_call.1} parent=0
    _
  %s5 = ssub.s32 1, %s3
  %s6 = scalar_select 0, %s5, %s3
  %8 = dma.hbm_to_smem %s0, 16, [#allocation3], [#allocation2]
  %9 = dma.done [#allocation2], 16
  %10 = sfence
  $region1: #{tpu_custom_call.1} parent=0
    #allocation4 [shape = 'u8[8192]{0}', space=vmem, size = 0x2000, scoped, tag = 'input window, operand 1, single buffered']
    #allocation5 [shape = 's32[1]{0}', space=sflag, size = 0x4, scoped, tag = 'scoped memory for tpu_custom_call.1']
    #allocation6 [shape = 's32[1]{0}', space=sflag, size = 0x4, scoped, tag = 'scoped memory for tpu_custom_call.1']
    #allocation7 [shape = 'u8[4096]{0}', space=vmem, size = 0x1000, scoped, tag = 'output window, operand 0, single buffered']
    %11 = vsyncpa [#allocation5], 0
    %12 = vsyncpa [#allocation6], 0
    // Predicated region
    $region2: #{tpu_custom_call.1} parent=1 // pred_check
      _
    $region3: #{tpu_custom_call.1} parent=1 // pred_check_branch
      %14 = sbr.rel (0) target = $region5
    $region4: #{tpu_custom_call.1} parent=1 // pred_region
      %s16 = ssub.s32 256, 256
      %17 = vsyncadd [#allocation5], %s16
      %s18 = sshll.u32 [#allocation4], 4
      %s19 = int_to_ptr.vmem [resolvable:$true] %s18
      %24 = dma.hbm_to_vmem [thread:$0]  %s1, 256, %s19, [#allocation5], 128, 128, 8
    $region5: #{tpu_custom_call.1} parent=1 // pred_fallthru
      _
    // Predicated region
    $region6: #{tpu_custom_call.1} parent=1 // pred_check
      _
    $region7: #{tpu_custom_call.1} parent=1 // pred_check_branch
      %26 = sbr.rel (0) target = $region9
    $region8: #{tpu_custom_call.1} parent=1 // pred_region
      %27 = dma.done [#allocation5], 256
    $region9: #{tpu_custom_call.1} parent=1 // pred_fallthru
      _
    %s28 = smul.u32 0, 8
    %s29 = sld [smem:[#allocation3 + %s28]]
    %s30 = scalar_lea.vmem [#allocation4], %s29
    %v31 = vld [vmem:[%s30] sm:$0x1]
    %32 = vst [vmem:[#allocation7] sm:$0x1] %v31
    %s33 = sadd.s32 %s28, 1
    %s34 = sld [smem:[#allocation3 + %s33]]
    %s35 = scalar_lea.vmem [#allocation4], %s34
    %v36 = vld [vmem:[%s35] sm:$0x1]
    %37 = vst [vmem:[#allocation7 + $0x1] sm:$0x1] %v36
    %s38 = sadd.s32 %s28, 2
    %s39 = sld [smem:[#allocation3 + %s38]]
    %s40 = scalar_lea.vmem [#allocation4], %s39
    %v41 = vld [vmem:[%s40] sm:$0x1]
    %42 = vst [vmem:[#allocation7 + $0x2] sm:$0x1] %v41
    %s43 = sadd.s32 %s28, 3
    %s44 = sld [smem:[#allocation3 + %s43]]
    %s45 = scalar_lea.vmem [#allocation4], %s44
    %v46 = vld [vmem:[%s45] sm:$0x1]
    %47 = vst [vmem:[#allocation7 + $0x3] sm:$0x1] %v46
    %s48 = sadd.s32 %s28, 4
    %s49 = sld [smem:[#allocation3 + %s48]]
    %s50 = scalar_lea.vmem [#allocation4], %s49
    %v51 = vld [vmem:[%s50] sm:$0x1]
    %52 = vst [vmem:[#allocation7 + $0x4] sm:$0x1] %v51
    %s53 = sadd.s32 %s28, 5
    %s54 = sld [smem:[#allocation3 + %s53]]
    %s55 = scalar_lea.vmem [#allocation4], %s54
    %v56 = vld [vmem:[%s55] sm:$0x1]
    %57 = vst [vmem:[#allocation7 + $0x5] sm:$0x1] %v56
    %s58 = sadd.s32 %s28, 6
    %s59 = sld [smem:[#allocation3 + %s58]]
    %s60 = scalar_lea.vmem [#allocation4], %s59
    %v61 = vld [vmem:[%s60] sm:$0x1]
    %62 = vst [vmem:[#allocation7 + $0x6] sm:$0x1] %v61
    %s63 = sadd.s32 %s28, 7
    %s64 = sld [smem:[#allocation3 + %s63]]
    %s65 = scalar_lea.vmem [#allocation4], %s64
    %v66 = vld [vmem:[%s65] sm:$0x1]
    %67 = vst [vmem:[#allocation7 + $0x7] sm:$0x1] %v66
    // Predicated region
    $region10: #{tpu_custom_call.1} parent=1 // pred_check
      _
    $region11: #{tpu_custom_call.1} parent=1 // pred_check_branch
      %69 = sbr.rel (0) target = $region13
    $region12: #{tpu_custom_call.1} parent=1 // pred_region
      %s71 = ssub.s32 128, 128
      %72 = vsyncadd [#allocation6], %s71
      %s74 = sshll.u32 [#allocation7], 4
      %s75 = int_to_ptr.vmem [resolvable:$true] %s74
      %77 = dma.vmem_to_hbm [thread:$0]  %s75, 128, %s2, [#allocation6]
    $region13: #{tpu_custom_call.1} parent=1 // pred_fallthru
      _
    // Predicated region
    $region14: #{tpu_custom_call.1} parent=1 // pred_check
      _
    $region15: #{tpu_custom_call.1} parent=1 // pred_check_branch
      %79 = sbr.rel (0) target = $region17
    $region16: #{tpu_custom_call.1} parent=1 // pred_region
      %80 = dma.done [#allocation6], 128
    $region17: #{tpu_custom_call.1} parent=1 // pred_fallthru
      _
    %81 = vsyncpa [#allocation5], 1
    %82 = vsyncpa [#allocation6], 1

</llo_original>
